<compile_context>
chip_gen: v6e
topology: v6e:2x2x1
jax: 0.10.0
libtpu: 0.0.40
codegen_flags: <defaults>
</compile_context>

<pallas_src>
import jax
import jax.numpy as jnp
from jax.experimental import pallas as pl
from jax.experimental.pallas import tpu as pltpu

LANE = 128
SUBLANE = 8


def _round_up(x, m):
    return ((x + m - 1) // m) * m


def _vmem_capacity_bytes():
    """Per-TensorCore VMEM capacity; conservative fallback = 64 MiB (v7x)."""
    try:
        info = pltpu.get_tpu_info()
        for name in ("vmem_capacity_bytes", "vmem_size_bytes", "vmem_bytes"):
            cap = getattr(info, name, None)
            if cap:
                return int(cap)
    except Exception:
        pass
    return 64 * 1024 * 1024


def graphsage_kernel(A_ref, M_ref, deg_ref, Xf_ref, Ef_ref, Wcat_ref, bias_ref, out_ref):
    # Exact f32 in-degrees (precomputed in the wrapper); divides only touch the narrow (tm, 1) vector.
    deg = deg_ref[...]                                      # (tm, 1) float32
    inv_degp1 = 1.0 / (deg + 1.0)
    inv_deg = jnp.where(deg > 0.0, 1.0 / jnp.maximum(deg, 1.0), 0.0)

    # bf16 x bf16 MXU passes with f32 accumulation.  A_ref already holds A + 2I (exact fold of the
    # self-feature term), so X only appears as the resident contraction operand.
    agg = jnp.dot(A_ref[...], Xf_ref[...], preferred_element_type=jnp.float32) * inv_degp1
    esum = jnp.dot(M_ref[...], Ef_ref[...], preferred_element_type=jnp.float32) * inv_deg

    # Fused output stage: one K = 2*D_in_p matmul against the stacked [Wn; We].
    lhs = jnp.concatenate([agg, esum], axis=1).astype(jnp.bfloat16)
    res = jnp.dot(lhs, Wcat_ref[...], preferred_element_type=jnp.float32)

    # bias row 0 = bn (always); row 1 = be (only for nodes with at least one incoming edge).
    bias = bias_ref[0:1, :] + jnp.where(deg > 0.0, bias_ref[1:2, :], 0.0)
    out_ref[...] = res + bias


def graphsage_layer(A, X, M, Ef, Wn, bn, We, be):
    N = A.shape[0]
    E = M.shape[1]
    D_in = X.shape[1]
    D_out = Wn.shape[1]

    D_in_p = _round_up(D_in, LANE)
    D_out_p = _round_up(D_out, LANE)
    E_p = _round_up(E, LANE)

    # -------------------------------------------------------------- VMEM budgeting (per TensorCore)
    vmem_cap = _vmem_capacity_bytes()
    n_cols_est = _round_up(N, LANE)
    # Grid-invariant residents (single-buffered): bf16 X, Ef, [Wn;We] + small f32 bias.
    resident_bytes = (2 * (n_cols_est * D_in_p + E_p * D_in_p + 2 * D_in_p * D_out_p)
                      + SUBLANE * D_out_p * 4)
    nbuf_budget = 3 if D_in_p <= 256 else 2           # deeper A/M pipeline in the DMA-bound regime
    per_row_bytes = (nbuf_budget * 2 * (n_cols_est + E_p)   # streamed bf16 A / M tiles
                     + 2 * LANE * 4                          # streamed (tm,1) deg tile, lane-padded f32
                     + 2 * D_out_p * 4                       # f32 output tile, double-buffered
                     + (4 * D_in_p + 2 * D_out_p) * 4)       # in-kernel f32 temporaries
    tm_budget = (int(vmem_cap * 0.75) - resident_bytes) // max(per_row_bytes, 1)
    tm_budget = max(SUBLANE, min(1024, tm_budget))

    # -------------------------------------------------------------- row tiling / padding geometry
    if _round_up(N, SUBLANE) <= tm_budget:
        tm = _round_up(N, SUBLANE)                     # whole graph in one row tile
        n_rows = tm
        n_cols = _round_up(N, LANE)
    elif tm_budget >= LANE:
        tm = (tm_budget // LANE) * LANE
        ntiles = -(-N // tm)
        tm = _round_up(-(-N // ntiles), LANE)          # rebalance tiles to minimize padded rows
        n_rows = tm * ntiles
        n_cols = n_rows
    else:
        tm = SUBLANE
        while tm * 2 <= tm_budget:
            tm *= 2                                    # power of two so tm | 128
        n_rows = _round_up(N, tm)
        n_cols = _round_up(N, LANE)
    grid_steps = n_rows // tm

    # Exact in-degrees in f32.  (A/M entries are integer edge multiplicities: exact in bf16 up to 256,
    # but the degree sum itself must accumulate in f32.)
    deg = jnp.sum(A.astype(jnp.float32), axis=1, keepdims=True)
    deg_p = jnp.pad(deg, ((0, n_rows - N), (0, 0)))

    # Fold the self-feature term into the adjacency: A @ X + 2*X == (A + 2I) @ X.
    A2 = A.astype(jnp.float32) + 2.0 * jnp.eye(N, dtype=jnp.float32)
    A_p = jnp.pad(A2, ((0, n_rows - N), (0, n_cols - N))).astype(jnp.bfloat16)
    M_p = jnp.pad(M, ((0, n_rows - N), (0, E_p - E))).astype(jnp.bfloat16)
    Xf_p = jnp.pad(X, ((0, n_cols - N), (0, D_in_p - D_in))).astype(jnp.bfloat16)
    Ef_p = jnp.pad(Ef, ((0, E_p - E), (0, D_in_p - D_in))).astype(jnp.bfloat16)
    Wn_p = jnp.pad(Wn, ((0, D_in_p - D_in), (0, D_out_p - D_out)))
    We_p = jnp.pad(We, ((0, D_in_p - D_in), (0, D_out_p - D_out)))
    Wcat = jnp.concatenate([Wn_p, We_p], axis=0).astype(jnp.bfloat16)        # (2*D_in_p, D_out_p)
    bias = jnp.concatenate([jnp.pad(bn, ((0, 0), (0, D_out_p - D_out))),
                            jnp.pad(be, ((0, 0), (0, D_out_p - D_out)))],
                           axis=0).astype(jnp.float32)                       # (2, D_out_p)

    nbuf = nbuf_budget if grid_steps >= 4 else 2

    flops = 2 * n_rows * (n_cols * D_in_p + E_p * D_in_p + 2 * D_in_p * D_out_p)
    bytes_accessed = (A_p.size * 2 + M_p.size * 2 + Xf_p.size * 2 + Ef_p.size * 2
                      + Wcat.size * 2 + bias.size * 4 + deg_p.size * 4
                      + n_rows * D_out_p * 4)
    cost = pl.CostEstimate(flops=int(flops), transcendentals=0,
                           bytes_accessed=int(bytes_accessed))
    params = pltpu.CompilerParams(
        dimension_semantics=("parallel",),
        vmem_limit_bytes=int(vmem_cap * 0.85),
    )

    def _call(use_pipeline_modes):
        if use_pipeline_modes:
            stream = pl.Buffered(nbuf) if nbuf != 2 else None
            resident = pl.Buffered(1)        # grid-invariant blocks: second VMEM buffer is pure waste
        else:
            stream = resident = None

        def spec(shape, index_map, mode=None):
            if mode is not None:
                return pl.BlockSpec(shape, index_map, pipeline_mode=mode)
            return pl.BlockSpec(shape, index_map)

        inv = lambda i: (0, 0)
        in_specs = [
            spec((tm, n_cols), lambda i: (i, 0), stream),          # A + 2I row tile (bf16, streamed)
            spec((tm, E_p), lambda i: (i, 0), stream),             # M row tile (bf16, streamed)
            spec((tm, 1), lambda i: (i, 0)),                       # deg row tile (f32, streamed)
            spec((n_cols, D_in_p), inv, resident),                 # X       (bf16, resident)
            spec((E_p, D_in_p), inv, resident),                    # Ef      (bf16, resident)
            spec((2 * D_in_p, D_out_p), inv, resident),            # [Wn;We] (bf16, resident)
            spec((2, D_out_p), inv, resident),                     # [bn;be] (f32, resident)
        ]
        out_specs = pl.BlockSpec((tm, D_out_p), lambda i: (i, 0))
        return pl.pallas_call(
            graphsage_kernel,
            out_shape=jax.ShapeDtypeStruct((n_rows, D_out_p), jnp.float32),
            grid=(grid_steps,),
            in_specs=in_specs,
            out_specs=out_specs,
            compiler_params=params,
            cost_estimate=cost,
        )(A_p, M_p, deg_p, Xf_p, Ef_p, Wcat, bias)

    try:
        out_p = _call(True)
    except Exception:
        # Fallback for jax builds without BlockSpec pipeline_mode support: default double-buffering.
        out_p = _call(False)

    return out_p[:N, :D_out]


def graphsage_reference(A, X, M, Ef, Wn, bn, We, be):
    # Original (unfolded) dense formulation of the PyTorch module, full f32.
    deg = jnp.sum(A, axis=1, keepdims=True)
    degp1 = deg + 1.0
    h_neigh = (A @ X + X) / degp1
    sage = h_neigh @ Wn + bn
    sfeat = (X @ Wn) / degp1
    out = sage + sfeat
    e_t = Ef @ We + be
    he_sum = M @ e_t
    h_e = jnp.where(deg > 0.0, he_sum / jnp.maximum(deg, 1.0), 0.0)
    return out + h_e


if __name__ == "__main__":
    key = jax.random.PRNGKey(0)
    N, E, D_in, D_out = 8, 16, 8, 16

    k_src, k_dst, k_x, k_ef, k_wn, k_bn, k_we, k_be = jax.random.split(key, 8)

    # Deterministic random directed graph (multi-edges allowed, like DGL).
    src = jax.random.randint(k_src, (E,), 0, N)
    dst = jax.random.randint(k_dst, (E,), 0, N)
    A = jnp.zeros((N, N), jnp.float32).at[dst, src].add(1.0)    # A[dst, src] = edge multiplicity
    M = jnp.zeros((N, E), jnp.float32).at[dst, jnp.arange(E)].add(1.0)

    # Node / edge features.
    X = jax.random.normal(k_x, (N, D_in), jnp.float32)
    Ef = jax.random.normal(k_ef, (E, D_in), jnp.float32)

    # Parameters (stored pre-transposed as (D_in, D_out)).
    Wn = jax.random.normal(k_wn, (D_in, D_out), jnp.float32) * 0.1   # sageconv.fc_neigh.weight^T
    bn = jax.random.normal(k_bn, (1, D_out), jnp.float32) * 0.1      # sageconv gcn bias
    We = jax.random.normal(k_we, (D_in, D_out), jnp.float32) * 0.1   # edge_apply_func.weight^T
    be = jax.random.normal(k_be, (1, D_out), jnp.float32) * 0.1      # edge_apply_func.bias

    out = graphsage_layer(A, X, M, Ef, Wn, bn, We, be)
    out = jax.block_until_ready(out)

    ref = graphsage_reference(A, X, M, Ef, Wn, bn, We, be)
    assert out.shape == (N, D_out)
    # bf16 MXU path vs f32 reference -> bf16-level tolerance.
    err = float(jnp.max(jnp.abs(out - ref)))
    assert jnp.allclose(out, ref, atol=5e-2, rtol=5e-2), err

    print("KERNEL_OK")
</pallas_src>

<mosaic_0001>
module attributes {stable_mosaic.version = 11 : i64} {
  func.func @graphsage_kernel(%arg0: i32, %arg1: memref<8x128xbf16, #tpu.memory_space<vmem>>, %arg2: memref<8x128xbf16, #tpu.memory_space<vmem>>, %arg3: memref<8x1xf32, #tpu.memory_space<vmem>>, %arg4: memref<128x128xbf16, #tpu.memory_space<vmem>>, %arg5: memref<128x128xbf16, #tpu.memory_space<vmem>>, %arg6: memref<256x128xbf16, #tpu.memory_space<vmem>>, %arg7: memref<2x128xf32, #tpu.memory_space<vmem>>, %arg8: memref<8x128xf32, #tpu.memory_space<vmem>>) attributes {dimension_semantics = [#tpu.dimension_semantics<parallel>], iteration_bounds = array<i64: 1>, scalar_prefetch = 0 : i64, scratch_operands = 0 : i64, tpu.core_type = #tpu.core_type<tc>, window_params = [{transform_indices = @transform_0, window_bounds = array<i64: 8, 128>}, {transform_indices = @transform_1, window_bounds = array<i64: 8, 128>}, {transform_indices = @transform_2, window_bounds = array<i64: 8, 1>}, {pipeline_mode = #tpu.pipeline_mode<synchronous>, transform_indices = @transform_3, window_bounds = array<i64: 128, 128>}, {pipeline_mode = #tpu.pipeline_mode<synchronous>, transform_indices = @transform_4, window_bounds = array<i64: 128, 128>}, {pipeline_mode = #tpu.pipeline_mode<synchronous>, transform_indices = @transform_5, window_bounds = array<i64: 256, 128>}, {pipeline_mode = #tpu.pipeline_mode<synchronous>, transform_indices = @transform_6, window_bounds = array<i64: 2, 128>}, {transform_indices = @transform_7, window_bounds = array<i64: 8, 128>}]} {
    %c0 = arith.constant 0 : index
    %c0_0 = arith.constant 0 : index
    %0 = vector.load %arg3[%c0, %c0_0] : memref<8x1xf32, #tpu.memory_space<vmem>>, vector<8x1xf32>
    %cst = arith.constant 1.000000e+00 : f32
    %1 = vector.broadcast %cst : f32 to vector<8x1xf32>
    %2 = arith.addf %0, %1 : vector<8x1xf32>
    %cst_1 = arith.constant 1.000000e+00 : f32
    %3 = vector.broadcast %cst_1 : f32 to vector<8x1xf32>
    %4 = arith.divf %3, %2 : vector<8x1xf32>
    %cst_2 = arith.constant 0.000000e+00 : f32
    %5 = vector.broadcast %cst_2 : f32 to vector<8x1xf32>
    %6 = arith.cmpf ogt, %0, %5 : vector<8x1xf32>
    %cst_3 = arith.constant 1.000000e+00 : f32
    %7 = vector.broadcast %cst_3 : f32 to vector<8x1xf32>
    %8 = arith.maximumf %0, %7 : vector<8x1xf32>
    %cst_4 = arith.constant 1.000000e+00 : f32
    %9 = vector.broadcast %cst_4 : f32 to vector<8x1xf32>
    %10 = arith.divf %9, %8 : vector<8x1xf32>
    %cst_5 = arith.constant 0.000000e+00 : f32
    %11 = vector.broadcast %cst_5 : f32 to vector<8x1xf32>
    %12 = arith.select %6, %10, %11 : vector<8x1xi1>, vector<8x1xf32>
    %c0_6 = arith.constant 0 : index
    %c0_7 = arith.constant 0 : index
    %13 = vector.load %arg1[%c0_6, %c0_7] : memref<8x128xbf16, #tpu.memory_space<vmem>>, vector<8x128xbf16>
    %c0_8 = arith.constant 0 : index
    %c0_9 = arith.constant 0 : index
    %14 = vector.load %arg4[%c0_8, %c0_9] : memref<128x128xbf16, #tpu.memory_space<vmem>>, vector<128x128xbf16>
    %cst_10 = arith.constant dense<0.000000e+00> : vector<8x128xf32>
    %15 = tpu.matmul %13, %14, %cst_10 {dimension_numbers = #tpu.dot_dimension_numbers<[1], [0], [0], [1], [0, 0, 1, 1], [], []>} : vector<8x128xbf16>, vector<128x128xbf16>, vector<8x128xf32> -> vector<8x128xf32>
    %16 = vector.broadcast %4 : vector<8x1xf32> to vector<8x128xf32>
    %17 = arith.mulf %15, %16 : vector<8x128xf32>
    %c0_11 = arith.constant 0 : index
    %c0_12 = arith.constant 0 : index
    %18 = vector.load %arg2[%c0_11, %c0_12] : memref<8x128xbf16, #tpu.memory_space<vmem>>, vector<8x128xbf16>
    %c0_13 = arith.constant 0 : index
    %c0_14 = arith.constant 0 : index
    %19 = vector.load %arg5[%c0_13, %c0_14] : memref<128x128xbf16, #tpu.memory_space<vmem>>, vector<128x128xbf16>
    %cst_15 = arith.constant dense<0.000000e+00> : vector<8x128xf32>
    %20 = tpu.matmul %18, %19, %cst_15 {dimension_numbers = #tpu.dot_dimension_numbers<[1], [0], [0], [1], [0, 0, 1, 1], [], []>} : vector<8x128xbf16>, vector<128x128xbf16>, vector<8x128xf32> -> vector<8x128xf32>
    %21 = vector.broadcast %12 : vector<8x1xf32> to vector<8x128xf32>
    %22 = arith.mulf %20, %21 : vector<8x128xf32>
    %23 = tpu.concatenate %17, %22 in 1 : vector<8x128xf32>, vector<8x128xf32> -> vector<8x256xf32>
    %24 = arith.truncf %23 : vector<8x256xf32> to vector<8x256xbf16>
    %c0_16 = arith.constant 0 : index
    %c0_17 = arith.constant 0 : index
    %25 = vector.load %arg6[%c0_16, %c0_17] : memref<256x128xbf16, #tpu.memory_space<vmem>>, vector<256x128xbf16>
    %cst_18 = arith.constant dense<0.000000e+00> : vector<8x128xf32>
    %26 = tpu.matmul %24, %25, %cst_18 {dimension_numbers = #tpu.dot_dimension_numbers<[1], [0], [0], [1], [0, 0, 1, 1], [], []>} : vector<8x256xbf16>, vector<256x128xbf16>, vector<8x128xf32> -> vector<8x128xf32>
    %c0_19 = arith.constant 0 : index
    %c0_20 = arith.constant 0 : index
    %27 = vector.load %arg7[%c0_19, %c0_20] : memref<2x128xf32, #tpu.memory_space<vmem>>, vector<1x128xf32>
    %cst_21 = arith.constant 0.000000e+00 : f32
    %28 = vector.broadcast %cst_21 : f32 to vector<8x1xf32>
    %29 = arith.cmpf ogt, %0, %28 : vector<8x1xf32>
    %c1 = arith.constant 1 : index
    %c0_22 = arith.constant 0 : index
    %30 = vector.load %arg7[%c1, %c0_22] : memref<2x128xf32, #tpu.memory_space<vmem>>, vector<1x128xf32>
    %cst_23 = arith.constant 0.000000e+00 : f32
    %31 = vector.shape_cast %29 : vector<8x1xi1> to vector<8x1xi1>
    %32 = vector.broadcast %31 : vector<8x1xi1> to vector<8x128xi1>
    %33 = vector.shape_cast %30 : vector<1x128xf32> to vector<1x128xf32>
    %34 = vector.broadcast %33 : vector<1x128xf32> to vector<8x128xf32>
    %35 = vector.broadcast %cst_23 : f32 to vector<8x128xf32>
    %36 = arith.select %32, %34, %35 : vector<8x128xi1>, vector<8x128xf32>
    %37 = vector.broadcast %27 : vector<1x128xf32> to vector<8x128xf32>
    %38 = arith.addf %37, %36 : vector<8x128xf32>
    %39 = arith.addf %26, %38 : vector<8x128xf32>
    %c0_24 = arith.constant 0 : index
    %c0_25 = arith.constant 0 : index
    %40 = vector.load %arg8[%c0_24, %c0_25] : memref<8x128xf32, #tpu.memory_space<vmem>>, vector<8x128xf32>
    tpu.vector_store %arg8[%c0_24, %c0_25], %39 {strides = array<i32>} : memref<8x128xf32, #tpu.memory_space<vmem>>, vector<8x128xf32>,
    return
  }
  func.func @transform_0(%arg0: i32) -> (i32, i32) {
    %c0_i32 = arith.constant 0 : i32
    %c0_i32_0 = arith.constant 0 : i32
    return %arg0, %c0_i32 : i32, i32
  }
  func.func @transform_1(%arg0: i32) -> (i32, i32) {
    %c0_i32 = arith.constant 0 : i32
    %c0_i32_0 = arith.constant 0 : i32
    return %arg0, %c0_i32 : i32, i32
  }
  func.func @transform_2(%arg0: i32) -> (i32, i32) {
    %c0_i32 = arith.constant 0 : i32
    %c0_i32_0 = arith.constant 0 : i32
    return %arg0, %c0_i32 : i32, i32
  }
  func.func @transform_3(%arg0: i32) -> (i32, i32) {
    %c0_i32 = arith.constant 0 : i32
    %c0_i32_0 = arith.constant 0 : i32
    %c0_i32_1 = arith.constant 0 : i32
    return %c0_i32, %c0_i32_0 : i32, i32
  }
  func.func @transform_4(%arg0: i32) -> (i32, i32) {
    %c0_i32 = arith.constant 0 : i32
    %c0_i32_0 = arith.constant 0 : i32
    %c0_i32_1 = arith.constant 0 : i32
    return %c0_i32, %c0_i32_0 : i32, i32
  }
  func.func @transform_5(%arg0: i32) -> (i32, i32) {
    %c0_i32 = arith.constant 0 : i32
    %c0_i32_0 = arith.constant 0 : i32
    %c0_i32_1 = arith.constant 0 : i32
    return %c0_i32, %c0_i32_0 : i32, i32
  }
  func.func @transform_6(%arg0: i32) -> (i32, i32) {
    %c0_i32 = arith.constant 0 : i32
    %c0_i32_0 = arith.constant 0 : i32
    %c0_i32_1 = arith.constant 0 : i32
    return %c0_i32, %c0_i32_0 : i32, i32
  }
  func.func @transform_7(%arg0: i32) -> (i32, i32) {
    %c0_i32 = arith.constant 0 : i32
    %c0_i32_0 = arith.constant 0 : i32
    return %arg0, %c0_i32 : i32, i32
  }
}

module attributes {stable_mosaic.version = 11 : i64} {
  func.func @graphsage_kernel(%arg0: i32, %arg1: memref<8x128xbf16, #tpu.memory_space<vmem>>, %arg2: memref<8x128xbf16, #tpu.memory_space<vmem>>, %arg3: memref<8x1xf32, #tpu.memory_space<vmem>>, %arg4: memref<128x128xbf16, #tpu.memory_space<vmem>>, %arg5: memref<128x128xbf16, #tpu.memory_space<vmem>>, %arg6: memref<256x128xbf16, #tpu.memory_space<vmem>>, %arg7: memref<2x128xf32, #tpu.memory_space<vmem>>, %arg8: memref<8x128xf32, #tpu.memory_space<vmem>>) attributes {dimension_semantics = [#tpu.dimension_semantics<parallel>], iteration_bounds = array<i64: 1>, scalar_prefetch = 0 : i64, scratch_operands = 0 : i64, tpu.core_type = #tpu.core_type<tc>, window_params = [{transform_indices = @transform_0, window_bounds = array<i64: 8, 128>}, {transform_indices = @transform_1, window_bounds = array<i64: 8, 128>}, {transform_indices = @transform_2, window_bounds = array<i64: 8, 1>}, {pipeline_mode = #tpu.pipeline_mode<synchronous>, transform_indices = @transform_3, window_bounds = array<i64: 128, 128>}, {pipeline_mode = #tpu.pipeline_mode<synchronous>, transform_indices = @transform_4, window_bounds = array<i64: 128, 128>}, {pipeline_mode = #tpu.pipeline_mode<synchronous>, transform_indices = @transform_5, window_bounds = array<i64: 256, 128>}, {pipeline_mode = #tpu.pipeline_mode<synchronous>, transform_indices = @transform_6, window_bounds = array<i64: 2, 128>}, {transform_indices = @transform_7, window_bounds = array<i64: 8, 128>}]} {
    %c0 = arith.constant 0 : index
    %c0_0 = arith.constant 0 : index
    %0 = vector.load %arg3[%c0, %c0_0] : memref<8x1xf32, #tpu.memory_space<vmem>>, vector<8x1xf32>
    %cst = arith.constant 1.000000e+00 : f32
    %1 = vector.broadcast %cst : f32 to vector<8x1xf32>
    %2 = arith.addf %0, %1 : vector<8x1xf32>
    %cst_1 = arith.constant 1.000000e+00 : f32
    %3 = vector.broadcast %cst_1 : f32 to vector<8x1xf32>
    %4 = arith.divf %3, %2 : vector<8x1xf32>
    %cst_2 = arith.constant 0.000000e+00 : f32
    %5 = vector.broadcast %cst_2 : f32 to vector<8x1xf32>
    %6 = arith.cmpf ogt, %0, %5 : vector<8x1xf32>
    %cst_3 = arith.constant 1.000000e+00 : f32
    %7 = vector.broadcast %cst_3 : f32 to vector<8x1xf32>
    %8 = arith.maximumf %0, %7 : vector<8x1xf32>
    %cst_4 = arith.constant 1.000000e+00 : f32
    %9 = vector.broadcast %cst_4 : f32 to vector<8x1xf32>
    %10 = arith.divf %9, %8 : vector<8x1xf32>
    %cst_5 = arith.constant 0.000000e+00 : f32
    %11 = vector.broadcast %cst_5 : f32 to vector<8x1xf32>
    %12 = arith.select %6, %10, %11 : vector<8x1xi1>, vector<8x1xf32>
    %c0_6 = arith.constant 0 : index
    %c0_7 = arith.constant 0 : index
    %13 = vector.load %arg1[%c0_6, %c0_7] : memref<8x128xbf16, #tpu.memory_space<vmem>>, vector<8x128xbf16>
    %c0_8 = arith.constant 0 : index
    %c0_9 = arith.constant 0 : index
    %14 = vector.load %arg4[%c0_8, %c0_9] : memref<128x128xbf16, #tpu.memory_space<vmem>>, vector<128x128xbf16>
    %cst_10 = arith.constant dense<0.000000e+00> : vector<8x128xf32>
    %15 = tpu.matmul %13, %14, %cst_10 {dimension_numbers = #tpu.dot_dimension_numbers<[1], [0], [0], [1], [0, 0, 1, 1], [], []>} : vector<8x128xbf16>, vector<128x128xbf16>, vector<8x128xf32> -> vector<8x128xf32>
    %16 = vector.broadcast %4 : vector<8x1xf32> to vector<8x128xf32>
    %17 = arith.mulf %15, %16 : vector<8x128xf32>
    %c0_11 = arith.constant 0 : index
    %c0_12 = arith.constant 0 : index
    %18 = vector.load %arg2[%c0_11, %c0_12] : memref<8x128xbf16, #tpu.memory_space<vmem>>, vector<8x128xbf16>
    %c0_13 = arith.constant 0 : index
    %c0_14 = arith.constant 0 : index
    %19 = vector.load %arg5[%c0_13, %c0_14] : memref<128x128xbf16, #tpu.memory_space<vmem>>, vector<128x128xbf16>
    %cst_15 = arith.constant dense<0.000000e+00> : vector<8x128xf32>
    %20 = tpu.matmul %18, %19, %cst_15 {dimension_numbers = #tpu.dot_dimension_numbers<[1], [0], [0], [1], [0, 0, 1, 1], [], []>} : vector<8x128xbf16>, vector<128x128xbf16>, vector<8x128xf32> -> vector<8x128xf32>
    %21 = vector.broadcast %12 : vector<8x1xf32> to vector<8x128xf32>
    %22 = arith.mulf %20, %21 : vector<8x128xf32>
    %23 = tpu.concatenate %17, %22 in 1 : vector<8x128xf32>, vector<8x128xf32> -> vector<8x256xf32>
    %24 = arith.truncf %23 : vector<8x256xf32> to vector<8x256xbf16>
    %c0_16 = arith.constant 0 : index
    %c0_17 = arith.constant 0 : index
    %25 = vector.load %arg6[%c0_16, %c0_17] : memref<256x128xbf16, #tpu.memory_space<vmem>>, vector<256x128xbf16>
    %cst_18 = arith.constant dense<0.000000e+00> : vector<8x128xf32>
    %26 = tpu.matmul %24, %25, %cst_18 {dimension_numbers = #tpu.dot_dimension_numbers<[1], [0], [0], [1], [0, 0, 1, 1], [], []>} : vector<8x256xbf16>, vector<256x128xbf16>, vector<8x128xf32> -> vector<8x128xf32>
    %c0_19 = arith.constant 0 : index
    %c0_20 = arith.constant 0 : index
    %27 = vector.load %arg7[%c0_19, %c0_20] : memref<2x128xf32, #tpu.memory_space<vmem>>, vector<1x128xf32>
    %cst_21 = arith.constant 0.000000e+00 : f32
    %28 = vector.broadcast %cst_21 : f32 to vector<8x1xf32>
    %29 = arith.cmpf ogt, %0, %28 : vector<8x1xf32>
    %c1 = arith.constant 1 : index
    %c0_22 = arith.constant 0 : index
    %30 = vector.load %arg7[%c1, %c0_22] : memref<2x128xf32, #tpu.memory_space<vmem>>, vector<1x128xf32>
    %cst_23 = arith.constant 0.000000e+00 : f32
    %31 = vector.shape_cast %29 : vector<8x1xi1> to vector<8x1xi1>
    %32 = vector.broadcast %31 : vector<8x1xi1> to vector<8x128xi1>
    %33 = vector.shape_cast %30 : vector<1x128xf32> to vector<1x128xf32>
    %34 = vector.broadcast %33 : vector<1x128xf32> to vector<8x128xf32>
    %35 = vector.broadcast %cst_23 : f32 to vector<8x128xf32>
    %36 = arith.select %32, %34, %35 : vector<8x128xi1>, vector<8x128xf32>
    %37 = vector.broadcast %27 : vector<1x128xf32> to vector<8x128xf32>
    %38 = arith.addf %37, %36 : vector<8x128xf32>
    %39 = arith.addf %26, %38 : vector<8x128xf32>
    %c0_24 = arith.constant 0 : index
    %c0_25 = arith.constant 0 : index
    %40 = vector.load %arg8[%c0_24, %c0_25] : memref<8x128xf32, #tpu.memory_space<vmem>>, vector<8x128xf32>
    tpu.vector_store %arg8[%c0_24, %c0_25], %39 {strides = array<i32>} : memref<8x128xf32, #tpu.memory_space<vmem>>, vector<8x128xf32>,
    return
  }
  func.func @transform_0(%arg0: i32) -> (i32, i32) {
    %c0_i32 = arith.constant 0 : i32
    %c0_i32_0 = arith.constant 0 : i32
    return %arg0, %c0_i32 : i32, i32
  }
  func.func @transform_1(%arg0: i32) -> (i32, i32) {
    %c0_i32 = arith.constant 0 : i32
    %c0_i32_0 = arith.constant 0 : i32
    return %arg0, %c0_i32 : i32, i32
  }
  func.func @transform_2(%arg0: i32) -> (i32, i32) {
    %c0_i32 = arith.constant 0 : i32
    %c0_i32_0 = arith.constant 0 : i32
    return %arg0, %c0_i32 : i32, i32
  }
  func.func @transform_3(%arg0: i32) -> (i32, i32) {
    %c0_i32 = arith.constant 0 : i32
    %c0_i32_0 = arith.constant 0 : i32
    %c0_i32_1 = arith.constant 0 : i32
    return %c0_i32, %c0_i32_0 : i32, i32
  }
  func.func @transform_4(%arg0: i32) -> (i32, i32) {
    %c0_i32 = arith.constant 0 : i32
    %c0_i32_0 = arith.constant 0 : i32
    %c0_i32_1 = arith.constant 0 : i32
    return %c0_i32, %c0_i32_0 : i32, i32
  }
  func.func @transform_5(%arg0: i32) -> (i32, i32) {
    %c0_i32 = arith.constant 0 : i32
    %c0_i32_0 = arith.constant 0 : i32
    %c0_i32_1 = arith.constant 0 : i32
    return %c0_i32, %c0_i32_0 : i32, i32
  }
  func.func @transform_6(%arg0: i32) -> (i32, i32) {
    %c0_i32 = arith.constant 0 : i32
    %c0_i32_0 = arith.constant 0 : i32
    %c0_i32_1 = arith.constant 0 : i32
    return %c0_i32, %c0_i32_0 : i32, i32
  }
  func.func @transform_7(%arg0: i32) -> (i32, i32) {
    %c0_i32 = arith.constant 0 : i32
    %c0_i32_0 = arith.constant 0 : i32
    return %arg0, %c0_i32 : i32, i32
  }
}

</mosaic_0001>

<llo_original>
// kernel: tpu_custom_call.1
$region0: #{tpu_custom_call.1}
  #allocation0 [shape = 'u32[]', space=smem, size = 0x4, offset = 0x4, fixed_abs, tag = 'smem constant byte address 0x4 - core index']
  #allocation1 [shape = 'u32[144,128]{1,0:T(1,128)}', space=vmem, size = 0x12000, scoped, tag = 'internal scratch']
  %s0 = inlined_call_operand.vmem [shape: bf16[8,128], index: 0, kind: input, shape index: {}]
  %s1 = inlined_call_operand.vmem [shape: bf16[8,128], index: 1, kind: input, shape index: {}]
  %s2 = inlined_call_operand.vmem [shape: f32[8,1], index: 2, kind: input, shape index: {}]
  %s3 = inlined_call_operand.hbm [shape: bf16[128,128], index: 3, kind: input, shape index: {}]
  %s4 = inlined_call_operand.hbm [shape: bf16[128,128], index: 4, kind: input, shape index: {}]
  %s5 = inlined_call_operand.hbm [shape: bf16[256,128], index: 5, kind: input, shape index: {}]
  %s6 = inlined_call_operand.vmem [shape: f32[2,128], index: 6, kind: input, shape index: {}]
  %s7 = inlined_call_operand.hbm [shape: f32[8,128], index: 7, kind: output, shape index: {}]
  %s8 = sld [smem:[#allocation0]]
  $region50: #{tpu_custom_call.1} parent=0
    _
  %s10 = ssub.s32 1, %s8
  %s11 = scalar_select 0, %s10, %s8
  $region1: #{tpu_custom_call.1} parent=0
    #allocation2 [shape = 'u8[32768]{0}', space=vmem, size = 0x8000, scoped, tag = 'input window, operand 3, single buffered']
    #allocation3 [shape = 's32[1]{0}', space=sflag, size = 0x4, scoped, tag = 'scoped memory for tpu_custom_call.1']
    #allocation4 [shape = 's32[1]{0}', space=sflag, size = 0x4, scoped, tag = 'scoped memory for tpu_custom_call.1']
    #allocation5 [shape = 'u8[32768]{0}', space=vmem, size = 0x8000, scoped, tag = 'input window, operand 4, single buffered']
    #allocation6 [shape = 's32[1]{0}', space=sflag, size = 0x4, scoped, tag = 'scoped memory for tpu_custom_call.1']
    #allocation7 [shape = 'u8[65536]{0}', space=vmem, size = 0x10000, scoped, tag = 'input window, operand 5, single buffered']
    #allocation8 [shape = 'u8[4096]{0}', space=vmem, size = 0x1000, scoped, tag = 'output window, operand 0, single buffered']
    %12 = vsyncpa [#allocation3], 0
    %13 = vsyncpa [#allocation6], 0
    %14 = vsyncpa [#allocation4], 0
    // Predicated region
    $region2: #{tpu_custom_call.1} parent=1 // pred_check
      _
    $region3: #{tpu_custom_call.1} parent=1 // pred_check_branch
      %16 = sbr.rel (0) target = $region5
    $region4: #{tpu_custom_call.1} parent=1 // pred_region
      _
    $region5: #{tpu_custom_call.1} parent=1 // pred_fallthru
      _
    // Predicated region
    $region6: #{tpu_custom_call.1} parent=1 // pred_check
      _
    $region7: #{tpu_custom_call.1} parent=1 // pred_check_branch
      %18 = sbr.rel (0) target = $region9
    $region8: #{tpu_custom_call.1} parent=1 // pred_region
      _
    $region9: #{tpu_custom_call.1} parent=1 // pred_fallthru
      _
    // Predicated region
    $region10: #{tpu_custom_call.1} parent=1 // pred_check
      _
    $region11: #{tpu_custom_call.1} parent=1 // pred_check_branch
      %20 = sbr.rel (0) target = $region13
    $region12: #{tpu_custom_call.1} parent=1 // pred_region
      _
    $region13: #{tpu_custom_call.1} parent=1 // pred_fallthru
      _
    // Predicated region
    $region14: #{tpu_custom_call.1} parent=1 // pred_check
      _
    $region15: #{tpu_custom_call.1} parent=1 // pred_check_branch
      %22 = sbr.rel (0) target = $region17
    $region16: #{tpu_custom_call.1} parent=1 // pred_region
      %s24 = ssub.s32 1024, 1024
      %25 = vsyncadd [#allocation3], %s24
      %s26 = sshll.u32 [#allocation2], 4
      %s27 = int_to_ptr.vmem [resolvable:$true] %s26
      %32 = dma.hbm_to_vmem [thread:$0]  %s3, 1024, %s27, [#allocation3], 64, 64, 4
    $region17: #{tpu_custom_call.1} parent=1 // pred_fallthru
      _
    // Predicated region
    $region18: #{tpu_custom_call.1} parent=1 // pred_check
      _
    $region19: #{tpu_custom_call.1} parent=1 // pred_check_branch
      %34 = sbr.rel (0) target = $region21
    $region20: #{tpu_custom_call.1} parent=1 // pred_region
      %s36 = ssub.s32 1024, 1024
      %37 = vsyncadd [#allocation6], %s36
      %s38 = sshll.u32 [#allocation5], 4
      %s39 = int_to_ptr.vmem [resolvable:$true] %s38
      %44 = dma.hbm_to_vmem [thread:$0]  %s4, 1024, %s39, [#allocation6], 64, 64, 4
    $region21: #{tpu_custom_call.1} parent=1 // pred_fallthru
      _
    // Predicated region
    $region22: #{tpu_custom_call.1} parent=1 // pred_check
      _
    $region23: #{tpu_custom_call.1} parent=1 // pred_check_branch
      %46 = sbr.rel (0) target = $region25
    $region24: #{tpu_custom_call.1} parent=1 // pred_region
      %s48 = ssub.s32 2048, 2048
      %49 = vsyncadd [#allocation6], %s48
      %s50 = sshll.u32 [#allocation7], 4
      %s51 = int_to_ptr.vmem [resolvable:$true] %s50
      %56 = dma.hbm_to_vmem [thread:$0]  %s5, 2048, %s51, [#allocation6], 64, 64, 4
    $region25: #{tpu_custom_call.1} parent=1 // pred_fallthru
      _
    // Predicated region
    $region26: #{tpu_custom_call.1} parent=1 // pred_check
      _
    $region27: #{tpu_custom_call.1} parent=1 // pred_check_branch
      %58 = sbr.rel (0) target = $region29
    $region28: #{tpu_custom_call.1} parent=1 // pred_region
      _
    $region29: #{tpu_custom_call.1} parent=1 // pred_fallthru
      _
    // Predicated region
    $region30: #{tpu_custom_call.1} parent=1 // pred_check
      _
    $region31: #{tpu_custom_call.1} parent=1 // pred_check_branch
      %60 = sbr.rel (0) target = $region33
    $region32: #{tpu_custom_call.1} parent=1 // pred_region
      %61 = dma.done [#allocation3], 1024
    $region33: #{tpu_custom_call.1} parent=1 // pred_fallthru
      _
    // Predicated region
    $region34: #{tpu_custom_call.1} parent=1 // pred_check
      _
    $region35: #{tpu_custom_call.1} parent=1 // pred_check_branch
      %63 = sbr.rel (0) target = $region37
    $region36: #{tpu_custom_call.1} parent=1 // pred_region
      %64 = dma.done [#allocation6], 1024
    $region37: #{tpu_custom_call.1} parent=1 // pred_fallthru
      _
    // Predicated region
    $region38: #{tpu_custom_call.1} parent=1 // pred_check
      _
    $region39: #{tpu_custom_call.1} parent=1 // pred_check_branch
      %66 = sbr.rel (0) target = $region41
    $region40: #{tpu_custom_call.1} parent=1 // pred_region
      %67 = dma.done [#allocation6], 2048
    $region41: #{tpu_custom_call.1} parent=1 // pred_fallthru
      _
    %v69 = vld [vmem:[%s2] sm:$0xff]
    %v70 = vadd.f32 %v69, 1.0
    %v71 = vrcp.pop %v70
    %v72 = vmul.f32 1.0, %v71
    %vm73 = vcmp.gt.f32.partialorder %v69, 0.0
    %v74 = vmax.f32 %v69, 1.0
    %v75 = vrcp.pop %v74
    %v76 = vmul.f32 1.0, %v75
    %v77 = vsel %vm73, %v76, 0.0
    %v78 = vld [vmem:[%s0] sm:$0xf]
    %v79 = vld [vmem:[#allocation2] sm:$0xf]
    %v80 = vld [vmem:[#allocation2 + $0x4] sm:$0xf]
    %v81 = vld [vmem:[#allocation2 + $0x8] sm:$0xf]
    %v82 = vld [vmem:[#allocation2 + $0xc] sm:$0xf]
    %v83 = vld [vmem:[#allocation2 + $0x10] sm:$0xf]
    %v84 = vld [vmem:[#allocation2 + $0x14] sm:$0xf]
    %v85 = vld [vmem:[#allocation2 + $0x18] sm:$0xf]
    %v86 = vld [vmem:[#allocation2 + $0x1c] sm:$0xf]
    %v87 = vld [vmem:[#allocation2 + $0x20] sm:$0xf]
    %v88 = vld [vmem:[#allocation2 + $0x24] sm:$0xf]
    %v89 = vld [vmem:[#allocation2 + $0x28] sm:$0xf]
    %v90 = vld [vmem:[#allocation2 + $0x2c] sm:$0xf]
    %v91 = vld [vmem:[#allocation2 + $0x30] sm:$0xf]
    %v92 = vld [vmem:[#allocation2 + $0x34] sm:$0xf]
    %v93 = vld [vmem:[#allocation2 + $0x38] sm:$0xf]
    %v94 = vld [vmem:[#allocation2 + $0x3c] sm:$0xf]
    %v111 = vunpack.c.l.b16 %v79
    %v112 = vunpack.c.l.b16 %v80
    %v113 = vunpack.c.l.b16 %v81
    %v114 = vunpack.c.l.b16 %v82
    %v115 = vunpack.c.l.b16 %v83
    %v116 = vunpack.c.l.b16 %v84
    %v117 = vunpack.c.l.b16 %v85
    %v118 = vunpack.c.l.b16 %v86
    %v119 = vunpack.c.l.b16 %v87
    %v120 = vunpack.c.l.b16 %v88
    %v121 = vunpack.c.l.b16 %v89
    %v122 = vunpack.c.l.b16 %v90
    %v123 = vunpack.c.l.b16 %v91
    %v124 = vunpack.c.l.b16 %v92
    %v125 = vunpack.c.l.b16 %v93
    %v126 = vunpack.c.l.b16 %v94
    %v127 = vpack.c.b16 %v112, %v111
    %v128 = vpack.c.b16 %v114, %v113
    %v129 = vpack.c.b16 %v116, %v115
    %v130 = vpack.c.b16 %v118, %v117
    %v131 = vpack.c.b16 %v120, %v119
    %v132 = vpack.c.b16 %v122, %v121
    %v133 = vpack.c.b16 %v124, %v123
    %v134 = vpack.c.b16 %v126, %v125
    %143 = vmatprep.subr.bf16.mxu0 0
    %144 = vmatpush1.bf16.msra.mxu0 %v134
    %145 = vmatprep.subr.bf16.mxu0 0
    %146 = vmatpush1.bf16.msra.mxu0 %v133
    %147 = vmatprep.subr.bf16.mxu0 0
    %148 = vmatpush1.bf16.msra.mxu0 %v132
    %149 = vmatprep.subr.bf16.mxu0 0
    %150 = vmatpush1.bf16.msra.mxu0 %v131
    %151 = vmatprep.subr.bf16.mxu0 0
    %152 = vmatpush1.bf16.msra.mxu0 %v130
    %153 = vmatprep.subr.bf16.mxu0 0
    %154 = vmatpush1.bf16.msra.mxu0 %v129
    %155 = vmatprep.subr.bf16.mxu0 0
    %156 = vmatpush1.bf16.msra.mxu0 %v128
    %157 = vmatprep.subr.bf16.mxu0 0
    %158 = vmatpush1.bf16.msra.mxu0 %v127
    %159 = vmatprep.subr.bf16.mxu0 0
    %160 = vmatpush2.bf16.msra.mxu0 0
    %161 = vmatprep.subr.bf16.mxu0 0
    %162 = vmatpush2.bf16.msra.mxu0 0
    %163 = vmatprep.subr.bf16.mxu0 0
    %164 = vmatpush2.bf16.msra.mxu0 0
    %165 = vmatprep.subr.bf16.mxu0 0
    %166 = vmatpush2.bf16.msra.mxu0 0
    %167 = vmatprep.subr.bf16.mxu0 0
    %168 = vmatpush2.bf16.msra.mxu0 0
    %169 = vmatprep.subr.bf16.mxu0 0
    %170 = vmatpush2.bf16.msra.mxu0 0
    %171 = vmatprep.subr.bf16.mxu0 0
    %172 = vmatpush2.bf16.msra.mxu0 0
    %173 = vmatprep.subr.bf16.mxu0 0
    %174 = vmatpush2.bf16.msra.mxu0 0
    %175 = vmatprep.mubr.bf16.mxu0 0
    %176 = vmatmul.mubr.bf16.gmra.mxu0 %v78
    %v177 = vpop.f32.mrf.mxu0
    %v178 = vadd.f32 0.0, %v177
    %v179 = vpop.f32.mrf.mxu0
    %v180 = vpop.f32.mrf.mxu0
    %v181 = vpop.f32.mrf.mxu0
    %182 = vdwg.mxu0
    %184 = vset.pattern.permute.xlu0 0
    %185 = vperm.xlu0 %184, %v72
    %v186 = vpop.permute.xlu0 %185
    %v188 = vmul.f32 %v178, %v186
    %v189 = vld [vmem:[%s1] sm:$0xf]
    %v190 = vld [vmem:[#allocation5] sm:$0xf]
    %v191 = vld [vmem:[#allocation5 + $0x4] sm:$0xf]
    %v192 = vld [vmem:[#allocation5 + $0x8] sm:$0xf]
    %v193 = vld [vmem:[#allocation5 + $0xc] sm:$0xf]
    %v194 = vld [vmem:[#allocation5 + $0x10] sm:$0xf]
    %v195 = vld [vmem:[#allocation5 + $0x14] sm:$0xf]
    %v196 = vld [vmem:[#allocation5 + $0x18] sm:$0xf]
    %v197 = vld [vmem:[#allocation5 + $0x1c] sm:$0xf]
    %v198 = vld [vmem:[#allocation5 + $0x20] sm:$0xf]
    %v199 = vld [vmem:[#allocation5 + $0x24] sm:$0xf]
    %v200 = vld [vmem:[#allocation5 + $0x28] sm:$0xf]
    %v201 = vld [vmem:[#allocation5 + $0x2c] sm:$0xf]
    %v202 = vld [vmem:[#allocation5 + $0x30] sm:$0xf]
    %v203 = vld [vmem:[#allocation5 + $0x34] sm:$0xf]
    %v204 = vld [vmem:[#allocation5 + $0x38] sm:$0xf]
    %v205 = vld [vmem:[#allocation5 + $0x3c] sm:$0xf]
    %v222 = vunpack.c.l.b16 %v190
    %v223 = vunpack.c.l.b16 %v191
    %v224 = vunpack.c.l.b16 %v192
    %v225 = vunpack.c.l.b16 %v193
    %v226 = vunpack.c.l.b16 %v194
    %v227 = vunpack.c.l.b16 %v195
    %v228 = vunpack.c.l.b16 %v196
    %v229 = vunpack.c.l.b16 %v197
    %v230 = vunpack.c.l.b16 %v198
    %v231 = vunpack.c.l.b16 %v199
    %v232 = vunpack.c.l.b16 %v200
    %v233 = vunpack.c.l.b16 %v201
    %v234 = vunpack.c.l.b16 %v202
    %v235 = vunpack.c.l.b16 %v203
    %v236 = vunpack.c.l.b16 %v204
    %v237 = vunpack.c.l.b16 %v205
    %v238 = vpack.c.b16 %v223, %v222
    %v239 = vpack.c.b16 %v225, %v224
    %v240 = vpack.c.b16 %v227, %v226
    %v241 = vpack.c.b16 %v229, %v228
    %v242 = vpack.c.b16 %v231, %v230
    %v243 = vpack.c.b16 %v233, %v232
    %v244 = vpack.c.b16 %v235, %v234
    %v245 = vpack.c.b16 %v237, %v236
    %254 = vmatprep.subr.bf16.mxu0 0
    %255 = vmatpush1.bf16.msra.mxu0 %v245
    %256 = vmatprep.subr.bf16.mxu0 0
    %257 = vmatpush1.bf16.msra.mxu0 %v244
    %258 = vmatprep.subr.bf16.mxu0 0
    %259 = vmatpush1.bf16.msra.mxu0 %v243
    %260 = vmatprep.subr.bf16.mxu0 0
    %261 = vmatpush1.bf16.msra.mxu0 %v242
    %262 = vmatprep.subr.bf16.mxu0 0
    %263 = vmatpush1.bf16.msra.mxu0 %v241
    %264 = vmatprep.subr.bf16.mxu0 0
    %265 = vmatpush1.bf16.msra.mxu0 %v240
    %266 = vmatprep.subr.bf16.mxu0 0
    %267 = vmatpush1.bf16.msra.mxu0 %v239
    %268 = vmatprep.subr.bf16.mxu0 0
    %269 = vmatpush1.bf16.msra.mxu0 %v238
    %270 = vmatprep.subr.bf16.mxu0 0
    %271 = vmatpush2.bf16.msra.mxu0 0
    %272 = vmatprep.subr.bf16.mxu0 0
    %273 = vmatpush2.bf16.msra.mxu0 0
    %274 = vmatprep.subr.bf16.mxu0 0
    %275 = vmatpush2.bf16.msra.mxu0 0
    %276 = vmatprep.subr.bf16.mxu0 0
    %277 = vmatpush2.bf16.msra.mxu0 0
    %278 = vmatprep.subr.bf16.mxu0 0
    %279 = vmatpush2.bf16.msra.mxu0 0
    %280 = vmatprep.subr.bf16.mxu0 0
    %281 = vmatpush2.bf16.msra.mxu0 0
    %282 = vmatprep.subr.bf16.mxu0 0
    %283 = vmatpush2.bf16.msra.mxu0 0
    %284 = vmatprep.subr.bf16.mxu0 0
    %285 = vmatpush2.bf16.msra.mxu0 0
    %286 = vmatprep.mubr.bf16.mxu0 0
    %287 = vmatmul.mubr.bf16.gmra.mxu0 %v189
    %v288 = vpop.f32.mrf.mxu0
    %v289 = vadd.f32 0.0, %v288
    %v290 = vpop.f32.mrf.mxu0
    %v291 = vpop.f32.mrf.mxu0
    %v292 = vpop.f32.mrf.mxu0
    %293 = vdwg.mxu0
    %295 = vset.pattern.permute.xlu0 0
    %296 = vperm.xlu0 %295, %v77
    %v297 = vpop.permute.xlu0 %296
    %v299 = vmul.f32 %v289, %v297
    %v300 = vpack.c.bf16 %v188, %v188
    %v301 = vpack.c.bf16 %v299, %v299
    %v302 = vld [vmem:[#allocation7] sm:$0xf]
    %v303 = vld [vmem:[#allocation7 + $0x4] sm:$0xf]
    %v304 = vld [vmem:[#allocation7 + $0x8] sm:$0xf]
    %v305 = vld [vmem:[#allocation7 + $0xc] sm:$0xf]
    %v306 = vld [vmem:[#allocation7 + $0x10] sm:$0xf]
    %v307 = vld [vmem:[#allocation7 + $0x14] sm:$0xf]
    %v308 = vld [vmem:[#allocation7 + $0x18] sm:$0xf]
    %v309 = vld [vmem:[#allocation7 + $0x1c] sm:$0xf]
    %v310 = vld [vmem:[#allocation7 + $0x20] sm:$0xf]
    %v311 = vld [vmem:[#allocation7 + $0x24] sm:$0xf]
    %v312 = vld [vmem:[#allocation7 + $0x28] sm:$0xf]
    %v313 = vld [vmem:[#allocation7 + $0x2c] sm:$0xf]
    %v314 = vld [vmem:[#allocation7 + $0x30] sm:$0xf]
    %v315 = vld [vmem:[#allocation7 + $0x34] sm:$0xf]
    %v316 = vld [vmem:[#allocation7 + $0x38] sm:$0xf]
    %v317 = vld [vmem:[#allocation7 + $0x3c] sm:$0xf]
    %v318 = vld [vmem:[#allocation7 + $0x40] sm:$0xf]
    %v319 = vld [vmem:[#allocation7 + $0x44] sm:$0xf]
    %v320 = vld [vmem:[#allocation7 + $0x48] sm:$0xf]
    %v321 = vld [vmem:[#allocation7 + $0x4c] sm:$0xf]
    %v322 = vld [vmem:[#allocation7 + $0x50] sm:$0xf]
    %v323 = vld [vmem:[#allocation7 + $0x54] sm:$0xf]
    %v324 = vld [vmem:[#allocation7 + $0x58] sm:$0xf]
    %v325 = vld [vmem:[#allocation7 + $0x5c] sm:$0xf]
    %v326 = vld [vmem:[#allocation7 + $0x60] sm:$0xf]
    %v327 = vld [vmem:[#allocation7 + $0x64] sm:$0xf]
    %v328 = vld [vmem:[#allocation7 + $0x68] sm:$0xf]
    %v329 = vld [vmem:[#allocation7 + $0x6c] sm:$0xf]
    %v330 = vld [vmem:[#allocation7 + $0x70] sm:$0xf]
    %v331 = vld [vmem:[#allocation7 + $0x74] sm:$0xf]
    %v332 = vld [vmem:[#allocation7 + $0x78] sm:$0xf]
    %v333 = vld [vmem:[#allocation7 + $0x7c] sm:$0xf]
    %v334 = vld [vmem:[%s6] sm:$0x1]
    %v335 = vld [vmem:[%s6 + $0x1] sm:$0x1]
    %v336 = vsel %vm73, 1, 0
    %337 = vset.pattern.permute.xlu0 0
    %338 = vperm.xlu0 %337, %v336
    %v339 = vpop.permute.xlu0 %338
    %vm340 = vcmp.eq.s32.totalorder %v339, 1
    %v341 = vlaneseq
    %v342 = vshrl.u32 %v341, 7
    %v343 = vsub.s32 0, %v342
    %v344 = vrot.slane %v335, %v343
    %v345 = vsel %vm340, %v344, 0.0
    %v346 = vlaneseq
    %v347 = vshrl.u32 %v346, 7
    %v348 = vsub.s32 0, %v347
    %v349 = vrot.slane %v334, %v348
    %v350 = vadd.f32 %v349, %v345
    %v383 = vunpack.c.l.b16 %v302
    %v384 = vunpack.c.l.b16 %v303
    %v385 = vunpack.c.l.b16 %v304
    %v386 = vunpack.c.l.b16 %v305
    %v387 = vunpack.c.l.b16 %v306
    %v388 = vunpack.c.l.b16 %v307
    %v389 = vunpack.c.l.b16 %v308
    %v390 = vunpack.c.l.b16 %v309
    %v391 = vunpack.c.l.b16 %v310
    %v392 = vunpack.c.l.b16 %v311
    %v393 = vunpack.c.l.b16 %v312
    %v394 = vunpack.c.l.b16 %v313
    %v395 = vunpack.c.l.b16 %v314
    %v396 = vunpack.c.l.b16 %v315
    %v397 = vunpack.c.l.b16 %v316
    %v398 = vunpack.c.l.b16 %v317
    %v399 = vunpack.c.l.b16 %v318
    %v400 = vunpack.c.l.b16 %v319
    %v401 = vunpack.c.l.b16 %v320
    %v402 = vunpack.c.l.b16 %v321
    %v403 = vunpack.c.l.b16 %v322
    %v404 = vunpack.c.l.b16 %v323
    %v405 = vunpack.c.l.b16 %v324
    %v406 = vunpack.c.l.b16 %v325
    %v407 = vunpack.c.l.b16 %v326
    %v408 = vunpack.c.l.b16 %v327
    %v409 = vunpack.c.l.b16 %v328
    %v410 = vunpack.c.l.b16 %v329
    %v411 = vunpack.c.l.b16 %v330
    %v412 = vunpack.c.l.b16 %v331
    %v413 = vunpack.c.l.b16 %v332
    %v414 = vunpack.c.l.b16 %v333
    %v415 = vpack.c.b16 %v384, %v383
    %v416 = vpack.c.b16 %v386, %v385
    %v417 = vpack.c.b16 %v388, %v387
    %v418 = vpack.c.b16 %v390, %v389
    %v419 = vpack.c.b16 %v392, %v391
    %v420 = vpack.c.b16 %v394, %v393
    %v421 = vpack.c.b16 %v396, %v395
    %v422 = vpack.c.b16 %v398, %v397
    %v423 = vpack.c.b16 %v400, %v399
    %v424 = vpack.c.b16 %v402, %v401
    %v425 = vpack.c.b16 %v404, %v403
    %v426 = vpack.c.b16 %v406, %v405
    %v427 = vpack.c.b16 %v408, %v407
    %v428 = vpack.c.b16 %v410, %v409
    %v429 = vpack.c.b16 %v412, %v411
    %v430 = vpack.c.b16 %v414, %v413
    %447 = vmatprep.subr.bf16.mxu0 0
    %448 = vmatpush1.bf16.msra.mxu0 %v422
    %449 = vmatprep.subr.bf16.mxu0 0
    %450 = vmatpush1.bf16.msra.mxu0 %v421
    %451 = vmatprep.subr.bf16.mxu0 0
    %452 = vmatpush1.bf16.msra.mxu0 %v420
    %453 = vmatprep.subr.bf16.mxu0 0
    %454 = vmatpush1.bf16.msra.mxu0 %v419
    %455 = vmatprep.subr.bf16.mxu0 0
    %456 = vmatpush1.bf16.msra.mxu0 %v418
    %457 = vmatprep.subr.bf16.mxu0 0
    %458 = vmatpush1.bf16.msra.mxu0 %v417
    %459 = vmatprep.subr.bf16.mxu0 0
    %460 = vmatpush1.bf16.msra.mxu0 %v416
    %461 = vmatprep.subr.bf16.mxu0 0
    %462 = vmatpush1.bf16.msra.mxu0 %v415
    %463 = vmatprep.subr.bf16.mxu0 0
    %464 = vmatpush2.bf16.msra.mxu0 %v430
    %465 = vmatprep.subr.bf16.mxu0 0
    %466 = vmatpush2.bf16.msra.mxu0 %v429
    %467 = vmatprep.subr.bf16.mxu0 0
    %468 = vmatpush2.bf16.msra.mxu0 %v428
    %469 = vmatprep.subr.bf16.mxu0 0
    %470 = vmatpush2.bf16.msra.mxu0 %v427
    %471 = vmatprep.subr.bf16.mxu0 0
    %472 = vmatpush2.bf16.msra.mxu0 %v426
    %473 = vmatprep.subr.bf16.mxu0 0
    %474 = vmatpush2.bf16.msra.mxu0 %v425
    %475 = vmatprep.subr.bf16.mxu0 0
    %476 = vmatpush2.bf16.msra.mxu0 %v424
    %477 = vmatprep.subr.bf16.mxu0 0
    %478 = vmatpush2.bf16.msra.mxu0 %v423
    %479 = vmatprep.mubr.bf16.mxu0 %v301
    %480 = vmatmul.mubr.bf16.gmra.mxu0 %v300
    %v481 = vpop.f32.mrf.mxu0
    %v482 = vadd.f32 %v350, %v481
    %v483 = vpop.f32.mrf.mxu0
    %v484 = vpop.f32.mrf.mxu0
    %v485 = vpop.f32.mrf.mxu0
    %486 = vdwg.mxu0
    %487 = vst [vmem:[#allocation8] sm:$0xff] %v482
    // Predicated region
    $region42: #{tpu_custom_call.1} parent=1 // pred_check
      _
    $region43: #{tpu_custom_call.1} parent=1 // pred_check_branch
      %489 = sbr.rel (0) target = $region45
    $region44: #{tpu_custom_call.1} parent=1 // pred_region
      %s491 = ssub.s32 128, 128
      %492 = vsyncadd [#allocation4], %s491
      %s494 = sshll.u32 [#allocation8], 4
      %s495 = int_to_ptr.vmem [resolvable:$true] %s494
      %497 = dma.vmem_to_hbm [thread:$0]  %s495, 128, %s7, [#allocation4]
    $region45: #{tpu_custom_call.1} parent=1 // pred_fallthru
      _
    // Predicated region
    $region46: #{tpu_custom_call.1} parent=1 // pred_check
      _
    $region47: #{tpu_custom_call.1} parent=1 // pred_check_branch
      %499 = sbr.rel (0) target = $region49
    $region48: #{tpu_custom_call.1} parent=1 // pred_region
      %500 = dma.done [#allocation4], 128
    $region49: #{tpu_custom_call.1} parent=1 // pred_fallthru
      _
    %501 = vsyncpa [#allocation3], 1
    %502 = vsyncpa [#allocation6], 1
    %503 = vsyncpa [#allocation4], 1

// kernel: tpu_custom_call.1
$region0: #{tpu_custom_call.1}
  #allocation0 [shape = 'u32[]', space=smem, size = 0x4, offset = 0x4, fixed_abs, tag = 'smem constant byte address 0x4 - core index']
  #allocation1 [shape = 'u32[144,128]{1,0:T(1,128)}', space=vmem, size = 0x12000, scoped, tag = 'internal scratch']
  %s0 = inlined_call_operand.vmem [shape: bf16[8,128], index: 0, kind: input, shape index: {}]
  %s1 = inlined_call_operand.vmem [shape: bf16[8,128], index: 1, kind: input, shape index: {}]
  %s2 = inlined_call_operand.vmem [shape: f32[8,1], index: 2, kind: input, shape index: {}]
  %s3 = inlined_call_operand.hbm [shape: bf16[128,128], index: 3, kind: input, shape index: {}]
  %s4 = inlined_call_operand.hbm [shape: bf16[128,128], index: 4, kind: input, shape index: {}]
  %s5 = inlined_call_operand.hbm [shape: bf16[256,128], index: 5, kind: input, shape index: {}]
  %s6 = inlined_call_operand.vmem [shape: f32[2,128], index: 6, kind: input, shape index: {}]
  %s7 = inlined_call_operand.hbm [shape: f32[8,128], index: 7, kind: output, shape index: {}]
  %s8 = sld [smem:[#allocation0]]
  $region50: #{tpu_custom_call.1} parent=0
    _
  %s10 = ssub.s32 1, %s8
  %s11 = scalar_select 0, %s10, %s8
  $region1: #{tpu_custom_call.1} parent=0
    #allocation2 [shape = 'u8[32768]{0}', space=vmem, size = 0x8000, scoped, tag = 'input window, operand 3, single buffered']
    #allocation3 [shape = 's32[1]{0}', space=sflag, size = 0x4, scoped, tag = 'scoped memory for tpu_custom_call.1']
    #allocation4 [shape = 's32[1]{0}', space=sflag, size = 0x4, scoped, tag = 'scoped memory for tpu_custom_call.1']
    #allocation5 [shape = 'u8[32768]{0}', space=vmem, size = 0x8000, scoped, tag = 'input window, operand 4, single buffered']
    #allocation6 [shape = 's32[1]{0}', space=sflag, size = 0x4, scoped, tag = 'scoped memory for tpu_custom_call.1']
    #allocation7 [shape = 'u8[65536]{0}', space=vmem, size = 0x10000, scoped, tag = 'input window, operand 5, single buffered']
    #allocation8 [shape = 'u8[4096]{0}', space=vmem, size = 0x1000, scoped, tag = 'output window, operand 0, single buffered']
    %12 = vsyncpa [#allocation3], 0
    %13 = vsyncpa [#allocation6], 0
    %14 = vsyncpa [#allocation4], 0
    // Predicated region
    $region2: #{tpu_custom_call.1} parent=1 // pred_check
      _
    $region3: #{tpu_custom_call.1} parent=1 // pred_check_branch
      %16 = sbr.rel (0) target = $region5
    $region4: #{tpu_custom_call.1} parent=1 // pred_region
      _
    $region5: #{tpu_custom_call.1} parent=1 // pred_fallthru
      _
    // Predicated region
    $region6: #{tpu_custom_call.1} parent=1 // pred_check
      _
    $region7: #{tpu_custom_call.1} parent=1 // pred_check_branch
      %18 = sbr.rel (0) target = $region9
    $region8: #{tpu_custom_call.1} parent=1 // pred_region
      _
    $region9: #{tpu_custom_call.1} parent=1 // pred_fallthru
      _
    // Predicated region
    $region10: #{tpu_custom_call.1} parent=1 // pred_check
      _
    $region11: #{tpu_custom_call.1} parent=1 // pred_check_branch
      %20 = sbr.rel (0) target = $region13
    $region12: #{tpu_custom_call.1} parent=1 // pred_region
      _
    $region13: #{tpu_custom_call.1} parent=1 // pred_fallthru
      _
    // Predicated region
    $region14: #{tpu_custom_call.1} parent=1 // pred_check
      _
    $region15: #{tpu_custom_call.1} parent=1 // pred_check_branch
      %22 = sbr.rel (0) target = $region17
    $region16: #{tpu_custom_call.1} parent=1 // pred_region
      %s24 = ssub.s32 1024, 1024
      %25 = vsyncadd [#allocation3], %s24
      %s26 = sshll.u32 [#allocation2], 4
      %s27 = int_to_ptr.vmem [resolvable:$true] %s26
      %32 = dma.hbm_to_vmem [thread:$0]  %s3, 1024, %s27, [#allocation3], 64, 64, 4
    $region17: #{tpu_custom_call.1} parent=1 // pred_fallthru
      _
    // Predicated region
    $region18: #{tpu_custom_call.1} parent=1 // pred_check
      _
    $region19: #{tpu_custom_call.1} parent=1 // pred_check_branch
      %34 = sbr.rel (0) target = $region21
    $region20: #{tpu_custom_call.1} parent=1 // pred_region
      %s36 = ssub.s32 1024, 1024
      %37 = vsyncadd [#allocation6], %s36
      %s38 = sshll.u32 [#allocation5], 4
      %s39 = int_to_ptr.vmem [resolvable:$true] %s38
      %44 = dma.hbm_to_vmem [thread:$0]  %s4, 1024, %s39, [#allocation6], 64, 64, 4
    $region21: #{tpu_custom_call.1} parent=1 // pred_fallthru
      _
    // Predicated region
    $region22: #{tpu_custom_call.1} parent=1 // pred_check
      _
    $region23: #{tpu_custom_call.1} parent=1 // pred_check_branch
      %46 = sbr.rel (0) target = $region25
    $region24: #{tpu_custom_call.1} parent=1 // pred_region
      %s48 = ssub.s32 2048, 2048
      %49 = vsyncadd [#allocation6], %s48
      %s50 = sshll.u32 [#allocation7], 4
      %s51 = int_to_ptr.vmem [resolvable:$true] %s50
      %56 = dma.hbm_to_vmem [thread:$0]  %s5, 2048, %s51, [#allocation6], 64, 64, 4
    $region25: #{tpu_custom_call.1} parent=1 // pred_fallthru
      _
    // Predicated region
    $region26: #{tpu_custom_call.1} parent=1 // pred_check
      _
    $region27: #{tpu_custom_call.1} parent=1 // pred_check_branch
      %58 = sbr.rel (0) target = $region29
    $region28: #{tpu_custom_call.1} parent=1 // pred_region
      _
    $region29: #{tpu_custom_call.1} parent=1 // pred_fallthru
      _
    // Predicated region
    $region30: #{tpu_custom_call.1} parent=1 // pred_check
      _
    $region31: #{tpu_custom_call.1} parent=1 // pred_check_branch
      %60 = sbr.rel (0) target = $region33
    $region32: #{tpu_custom_call.1} parent=1 // pred_region
      %61 = dma.done [#allocation3], 1024
    $region33: #{tpu_custom_call.1} parent=1 // pred_fallthru
      _
    // Predicated region
    $region34: #{tpu_custom_call.1} parent=1 // pred_check
      _
    $region35: #{tpu_custom_call.1} parent=1 // pred_check_branch
      %63 = sbr.rel (0) target = $region37
    $region36: #{tpu_custom_call.1} parent=1 // pred_region
      %64 = dma.done [#allocation6], 1024
    $region37: #{tpu_custom_call.1} parent=1 // pred_fallthru
      _
    // Predicated region
    $region38: #{tpu_custom_call.1} parent=1 // pred_check
      _
    $region39: #{tpu_custom_call.1} parent=1 // pred_check_branch
      %66 = sbr.rel (0) target = $region41
    $region40: #{tpu_custom_call.1} parent=1 // pred_region
      %67 = dma.done [#allocation6], 2048
    $region41: #{tpu_custom_call.1} parent=1 // pred_fallthru
      _
    %v69 = vld [vmem:[%s2] sm:$0xff]
    %v70 = vadd.f32 %v69, 1.0
    %v71 = vrcp.pop %v70
    %v72 = vmul.f32 1.0, %v71
    %vm73 = vcmp.gt.f32.partialorder %v69, 0.0
    %v74 = vmax.f32 %v69, 1.0
    %v75 = vrcp.pop %v74
    %v76 = vmul.f32 1.0, %v75
    %v77 = vsel %vm73, %v76, 0.0
    %v78 = vld [vmem:[%s0] sm:$0xf]
    %v79 = vld [vmem:[#allocation2] sm:$0xf]
    %v80 = vld [vmem:[#allocation2 + $0x4] sm:$0xf]
    %v81 = vld [vmem:[#allocation2 + $0x8] sm:$0xf]
    %v82 = vld [vmem:[#allocation2 + $0xc] sm:$0xf]
    %v83 = vld [vmem:[#allocation2 + $0x10] sm:$0xf]
    %v84 = vld [vmem:[#allocation2 + $0x14] sm:$0xf]
    %v85 = vld [vmem:[#allocation2 + $0x18] sm:$0xf]
    %v86 = vld [vmem:[#allocation2 + $0x1c] sm:$0xf]
    %v87 = vld [vmem:[#allocation2 + $0x20] sm:$0xf]
    %v88 = vld [vmem:[#allocation2 + $0x24] sm:$0xf]
    %v89 = vld [vmem:[#allocation2 + $0x28] sm:$0xf]
    %v90 = vld [vmem:[#allocation2 + $0x2c] sm:$0xf]
    %v91 = vld [vmem:[#allocation2 + $0x30] sm:$0xf]
    %v92 = vld [vmem:[#allocation2 + $0x34] sm:$0xf]
    %v93 = vld [vmem:[#allocation2 + $0x38] sm:$0xf]
    %v94 = vld [vmem:[#allocation2 + $0x3c] sm:$0xf]
    %v111 = vunpack.c.l.b16 %v79
    %v112 = vunpack.c.l.b16 %v80
    %v113 = vunpack.c.l.b16 %v81
    %v114 = vunpack.c.l.b16 %v82
    %v115 = vunpack.c.l.b16 %v83
    %v116 = vunpack.c.l.b16 %v84
    %v117 = vunpack.c.l.b16 %v85
    %v118 = vunpack.c.l.b16 %v86
    %v119 = vunpack.c.l.b16 %v87
    %v120 = vunpack.c.l.b16 %v88
    %v121 = vunpack.c.l.b16 %v89
    %v122 = vunpack.c.l.b16 %v90
    %v123 = vunpack.c.l.b16 %v91
    %v124 = vunpack.c.l.b16 %v92
    %v125 = vunpack.c.l.b16 %v93
    %v126 = vunpack.c.l.b16 %v94
    %v127 = vpack.c.b16 %v112, %v111
    %v128 = vpack.c.b16 %v114, %v113
    %v129 = vpack.c.b16 %v116, %v115
    %v130 = vpack.c.b16 %v118, %v117
    %v131 = vpack.c.b16 %v120, %v119
    %v132 = vpack.c.b16 %v122, %v121
    %v133 = vpack.c.b16 %v124, %v123
    %v134 = vpack.c.b16 %v126, %v125
    %143 = vmatprep.subr.bf16.mxu0 0
    %144 = vmatpush1.bf16.msra.mxu0 %v134
    %145 = vmatprep.subr.bf16.mxu0 0
    %146 = vmatpush1.bf16.msra.mxu0 %v133
    %147 = vmatprep.subr.bf16.mxu0 0
    %148 = vmatpush1.bf16.msra.mxu0 %v132
    %149 = vmatprep.subr.bf16.mxu0 0
    %150 = vmatpush1.bf16.msra.mxu0 %v131
    %151 = vmatprep.subr.bf16.mxu0 0
    %152 = vmatpush1.bf16.msra.mxu0 %v130
    %153 = vmatprep.subr.bf16.mxu0 0
    %154 = vmatpush1.bf16.msra.mxu0 %v129
    %155 = vmatprep.subr.bf16.mxu0 0
    %156 = vmatpush1.bf16.msra.mxu0 %v128
    %157 = vmatprep.subr.bf16.mxu0 0
    %158 = vmatpush1.bf16.msra.mxu0 %v127
    %159 = vmatprep.subr.bf16.mxu0 0
    %160 = vmatpush2.bf16.msra.mxu0 0
    %161 = vmatprep.subr.bf16.mxu0 0
    %162 = vmatpush2.bf16.msra.mxu0 0
    %163 = vmatprep.subr.bf16.mxu0 0
    %164 = vmatpush2.bf16.msra.mxu0 0
    %165 = vmatprep.subr.bf16.mxu0 0
    %166 = vmatpush2.bf16.msra.mxu0 0
    %167 = vmatprep.subr.bf16.mxu0 0
    %168 = vmatpush2.bf16.msra.mxu0 0
    %169 = vmatprep.subr.bf16.mxu0 0
    %170 = vmatpush2.bf16.msra.mxu0 0
    %171 = vmatprep.subr.bf16.mxu0 0
    %172 = vmatpush2.bf16.msra.mxu0 0
    %173 = vmatprep.subr.bf16.mxu0 0
    %174 = vmatpush2.bf16.msra.mxu0 0
    %175 = vmatprep.mubr.bf16.mxu0 0
    %176 = vmatmul.mubr.bf16.gmra.mxu0 %v78
    %v177 = vpop.f32.mrf.mxu0
    %v178 = vadd.f32 0.0, %v177
    %v179 = vpop.f32.mrf.mxu0
    %v180 = vpop.f32.mrf.mxu0
    %v181 = vpop.f32.mrf.mxu0
    %182 = vdwg.mxu0
    %184 = vset.pattern.permute.xlu0 0
    %185 = vperm.xlu0 %184, %v72
    %v186 = vpop.permute.xlu0 %185
    %v188 = vmul.f32 %v178, %v186
    %v189 = vld [vmem:[%s1] sm:$0xf]
    %v190 = vld [vmem:[#allocation5] sm:$0xf]
    %v191 = vld [vmem:[#allocation5 + $0x4] sm:$0xf]
    %v192 = vld [vmem:[#allocation5 + $0x8] sm:$0xf]
    %v193 = vld [vmem:[#allocation5 + $0xc] sm:$0xf]
    %v194 = vld [vmem:[#allocation5 + $0x10] sm:$0xf]
    %v195 = vld [vmem:[#allocation5 + $0x14] sm:$0xf]
    %v196 = vld [vmem:[#allocation5 + $0x18] sm:$0xf]
    %v197 = vld [vmem:[#allocation5 + $0x1c] sm:$0xf]
    %v198 = vld [vmem:[#allocation5 + $0x20] sm:$0xf]
    %v199 = vld [vmem:[#allocation5 + $0x24] sm:$0xf]
    %v200 = vld [vmem:[#allocation5 + $0x28] sm:$0xf]
    %v201 = vld [vmem:[#allocation5 + $0x2c] sm:$0xf]
    %v202 = vld [vmem:[#allocation5 + $0x30] sm:$0xf]
    %v203 = vld [vmem:[#allocation5 + $0x34] sm:$0xf]
    %v204 = vld [vmem:[#allocation5 + $0x38] sm:$0xf]
    %v205 = vld [vmem:[#allocation5 + $0x3c] sm:$0xf]
    %v222 = vunpack.c.l.b16 %v190
    %v223 = vunpack.c.l.b16 %v191
    %v224 = vunpack.c.l.b16 %v192
    %v225 = vunpack.c.l.b16 %v193
    %v226 = vunpack.c.l.b16 %v194
    %v227 = vunpack.c.l.b16 %v195
    %v228 = vunpack.c.l.b16 %v196
    %v229 = vunpack.c.l.b16 %v197
    %v230 = vunpack.c.l.b16 %v198
    %v231 = vunpack.c.l.b16 %v199
    %v232 = vunpack.c.l.b16 %v200
    %v233 = vunpack.c.l.b16 %v201
    %v234 = vunpack.c.l.b16 %v202
    %v235 = vunpack.c.l.b16 %v203
    %v236 = vunpack.c.l.b16 %v204
    %v237 = vunpack.c.l.b16 %v205
    %v238 = vpack.c.b16 %v223, %v222
    %v239 = vpack.c.b16 %v225, %v224
    %v240 = vpack.c.b16 %v227, %v226
    %v241 = vpack.c.b16 %v229, %v228
    %v242 = vpack.c.b16 %v231, %v230
    %v243 = vpack.c.b16 %v233, %v232
    %v244 = vpack.c.b16 %v235, %v234
    %v245 = vpack.c.b16 %v237, %v236
    %254 = vmatprep.subr.bf16.mxu0 0
    %255 = vmatpush1.bf16.msra.mxu0 %v245
    %256 = vmatprep.subr.bf16.mxu0 0
    %257 = vmatpush1.bf16.msra.mxu0 %v244
    %258 = vmatprep.subr.bf16.mxu0 0
    %259 = vmatpush1.bf16.msra.mxu0 %v243
    %260 = vmatprep.subr.bf16.mxu0 0
    %261 = vmatpush1.bf16.msra.mxu0 %v242
    %262 = vmatprep.subr.bf16.mxu0 0
    %263 = vmatpush1.bf16.msra.mxu0 %v241
    %264 = vmatprep.subr.bf16.mxu0 0
    %265 = vmatpush1.bf16.msra.mxu0 %v240
    %266 = vmatprep.subr.bf16.mxu0 0
    %267 = vmatpush1.bf16.msra.mxu0 %v239
    %268 = vmatprep.subr.bf16.mxu0 0
    %269 = vmatpush1.bf16.msra.mxu0 %v238
    %270 = vmatprep.subr.bf16.mxu0 0
    %271 = vmatpush2.bf16.msra.mxu0 0
    %272 = vmatprep.subr.bf16.mxu0 0
    %273 = vmatpush2.bf16.msra.mxu0 0
    %274 = vmatprep.subr.bf16.mxu0 0
    %275 = vmatpush2.bf16.msra.mxu0 0
    %276 = vmatprep.subr.bf16.mxu0 0
    %277 = vmatpush2.bf16.msra.mxu0 0
    %278 = vmatprep.subr.bf16.mxu0 0
    %279 = vmatpush2.bf16.msra.mxu0 0
    %280 = vmatprep.subr.bf16.mxu0 0
    %281 = vmatpush2.bf16.msra.mxu0 0
    %282 = vmatprep.subr.bf16.mxu0 0
    %283 = vmatpush2.bf16.msra.mxu0 0
    %284 = vmatprep.subr.bf16.mxu0 0
    %285 = vmatpush2.bf16.msra.mxu0 0
    %286 = vmatprep.mubr.bf16.mxu0 0
    %287 = vmatmul.mubr.bf16.gmra.mxu0 %v189
    %v288 = vpop.f32.mrf.mxu0
    %v289 = vadd.f32 0.0, %v288
    %v290 = vpop.f32.mrf.mxu0
    %v291 = vpop.f32.mrf.mxu0
    %v292 = vpop.f32.mrf.mxu0
    %293 = vdwg.mxu0
    %295 = vset.pattern.permute.xlu0 0
    %296 = vperm.xlu0 %295, %v77
    %v297 = vpop.permute.xlu0 %296
    %v299 = vmul.f32 %v289, %v297
    %v300 = vpack.c.bf16 %v188, %v188
    %v301 = vpack.c.bf16 %v299, %v299
    %v302 = vld [vmem:[#allocation7] sm:$0xf]
    %v303 = vld [vmem:[#allocation7 + $0x4] sm:$0xf]
    %v304 = vld [vmem:[#allocation7 + $0x8] sm:$0xf]
    %v305 = vld [vmem:[#allocation7 + $0xc] sm:$0xf]
    %v306 = vld [vmem:[#allocation7 + $0x10] sm:$0xf]
    %v307 = vld [vmem:[#allocation7 + $0x14] sm:$0xf]
    %v308 = vld [vmem:[#allocation7 + $0x18] sm:$0xf]
    %v309 = vld [vmem:[#allocation7 + $0x1c] sm:$0xf]
    %v310 = vld [vmem:[#allocation7 + $0x20] sm:$0xf]
    %v311 = vld [vmem:[#allocation7 + $0x24] sm:$0xf]
    %v312 = vld [vmem:[#allocation7 + $0x28] sm:$0xf]
    %v313 = vld [vmem:[#allocation7 + $0x2c] sm:$0xf]
    %v314 = vld [vmem:[#allocation7 + $0x30] sm:$0xf]
    %v315 = vld [vmem:[#allocation7 + $0x34] sm:$0xf]
    %v316 = vld [vmem:[#allocation7 + $0x38] sm:$0xf]
    %v317 = vld [vmem:[#allocation7 + $0x3c] sm:$0xf]
    %v318 = vld [vmem:[#allocation7 + $0x40] sm:$0xf]
    %v319 = vld [vmem:[#allocation7 + $0x44] sm:$0xf]
    %v320 = vld [vmem:[#allocation7 + $0x48] sm:$0xf]
    %v321 = vld [vmem:[#allocation7 + $0x4c] sm:$0xf]
    %v322 = vld [vmem:[#allocation7 + $0x50] sm:$0xf]
    %v323 = vld [vmem:[#allocation7 + $0x54] sm:$0xf]
    %v324 = vld [vmem:[#allocation7 + $0x58] sm:$0xf]
    %v325 = vld [vmem:[#allocation7 + $0x5c] sm:$0xf]
    %v326 = vld [vmem:[#allocation7 + $0x60] sm:$0xf]
    %v327 = vld [vmem:[#allocation7 + $0x64] sm:$0xf]
    %v328 = vld [vmem:[#allocation7 + $0x68] sm:$0xf]
    %v329 = vld [vmem:[#allocation7 + $0x6c] sm:$0xf]
    %v330 = vld [vmem:[#allocation7 + $0x70] sm:$0xf]
    %v331 = vld [vmem:[#allocation7 + $0x74] sm:$0xf]
    %v332 = vld [vmem:[#allocation7 + $0x78] sm:$0xf]
    %v333 = vld [vmem:[#allocation7 + $0x7c] sm:$0xf]
    %v334 = vld [vmem:[%s6] sm:$0x1]
    %v335 = vld [vmem:[%s6 + $0x1] sm:$0x1]
    %v336 = vsel %vm73, 1, 0
    %337 = vset.pattern.permute.xlu0 0
    %338 = vperm.xlu0 %337, %v336
    %v339 = vpop.permute.xlu0 %338
    %vm340 = vcmp.eq.s32.totalorder %v339, 1
    %v341 = vlaneseq
    %v342 = vshrl.u32 %v341, 7
    %v343 = vsub.s32 0, %v342
    %v344 = vrot.slane %v335, %v343
    %v345 = vsel %vm340, %v344, 0.0
    %v346 = vlaneseq
    %v347 = vshrl.u32 %v346, 7
    %v348 = vsub.s32 0, %v347
    %v349 = vrot.slane %v334, %v348
    %v350 = vadd.f32 %v349, %v345
    %v383 = vunpack.c.l.b16 %v302
    %v384 = vunpack.c.l.b16 %v303
    %v385 = vunpack.c.l.b16 %v304
    %v386 = vunpack.c.l.b16 %v305
    %v387 = vunpack.c.l.b16 %v306
    %v388 = vunpack.c.l.b16 %v307
    %v389 = vunpack.c.l.b16 %v308
    %v390 = vunpack.c.l.b16 %v309
    %v391 = vunpack.c.l.b16 %v310
    %v392 = vunpack.c.l.b16 %v311
    %v393 = vunpack.c.l.b16 %v312
    %v394 = vunpack.c.l.b16 %v313
    %v395 = vunpack.c.l.b16 %v314
    %v396 = vunpack.c.l.b16 %v315
    %v397 = vunpack.c.l.b16 %v316
    %v398 = vunpack.c.l.b16 %v317
    %v399 = vunpack.c.l.b16 %v318
    %v400 = vunpack.c.l.b16 %v319
    %v401 = vunpack.c.l.b16 %v320
    %v402 = vunpack.c.l.b16 %v321
    %v403 = vunpack.c.l.b16 %v322
    %v404 = vunpack.c.l.b16 %v323
    %v405 = vunpack.c.l.b16 %v324
    %v406 = vunpack.c.l.b16 %v325
    %v407 = vunpack.c.l.b16 %v326
    %v408 = vunpack.c.l.b16 %v327
    %v409 = vunpack.c.l.b16 %v328
    %v410 = vunpack.c.l.b16 %v329
    %v411 = vunpack.c.l.b16 %v330
    %v412 = vunpack.c.l.b16 %v331
    %v413 = vunpack.c.l.b16 %v332
    %v414 = vunpack.c.l.b16 %v333
    %v415 = vpack.c.b16 %v384, %v383
    %v416 = vpack.c.b16 %v386, %v385
    %v417 = vpack.c.b16 %v388, %v387
    %v418 = vpack.c.b16 %v390, %v389
    %v419 = vpack.c.b16 %v392, %v391
    %v420 = vpack.c.b16 %v394, %v393
    %v421 = vpack.c.b16 %v396, %v395
    %v422 = vpack.c.b16 %v398, %v397
    %v423 = vpack.c.b16 %v400, %v399
    %v424 = vpack.c.b16 %v402, %v401
    %v425 = vpack.c.b16 %v404, %v403
    %v426 = vpack.c.b16 %v406, %v405
    %v427 = vpack.c.b16 %v408, %v407
    %v428 = vpack.c.b16 %v410, %v409
    %v429 = vpack.c.b16 %v412, %v411
    %v430 = vpack.c.b16 %v414, %v413
    %447 = vmatprep.subr.bf16.mxu0 0
    %448 = vmatpush1.bf16.msra.mxu0 %v422
    %449 = vmatprep.subr.bf16.mxu0 0
    %450 = vmatpush1.bf16.msra.mxu0 %v421
    %451 = vmatprep.subr.bf16.mxu0 0
    %452 = vmatpush1.bf16.msra.mxu0 %v420
    %453 = vmatprep.subr.bf16.mxu0 0
    %454 = vmatpush1.bf16.msra.mxu0 %v419
    %455 = vmatprep.subr.bf16.mxu0 0
    %456 = vmatpush1.bf16.msra.mxu0 %v418
    %457 = vmatprep.subr.bf16.mxu0 0
    %458 = vmatpush1.bf16.msra.mxu0 %v417
    %459 = vmatprep.subr.bf16.mxu0 0
    %460 = vmatpush1.bf16.msra.mxu0 %v416
    %461 = vmatprep.subr.bf16.mxu0 0
    %462 = vmatpush1.bf16.msra.mxu0 %v415
    %463 = vmatprep.subr.bf16.mxu0 0
    %464 = vmatpush2.bf16.msra.mxu0 %v430
    %465 = vmatprep.subr.bf16.mxu0 0
    %466 = vmatpush2.bf16.msra.mxu0 %v429
    %467 = vmatprep.subr.bf16.mxu0 0
    %468 = vmatpush2.bf16.msra.mxu0 %v428
    %469 = vmatprep.subr.bf16.mxu0 0
    %470 = vmatpush2.bf16.msra.mxu0 %v427
    %471 = vmatprep.subr.bf16.mxu0 0
    %472 = vmatpush2.bf16.msra.mxu0 %v426
    %473 = vmatprep.subr.bf16.mxu0 0
    %474 = vmatpush2.bf16.msra.mxu0 %v425
    %475 = vmatprep.subr.bf16.mxu0 0
    %476 = vmatpush2.bf16.msra.mxu0 %v424
    %477 = vmatprep.subr.bf16.mxu0 0
    %478 = vmatpush2.bf16.msra.mxu0 %v423
    %479 = vmatprep.mubr.bf16.mxu0 %v301
    %480 = vmatmul.mubr.bf16.gmra.mxu0 %v300
    %v481 = vpop.f32.mrf.mxu0
    %v482 = vadd.f32 %v350, %v481
    %v483 = vpop.f32.mrf.mxu0
    %v484 = vpop.f32.mrf.mxu0
    %v485 = vpop.f32.mrf.mxu0
    %486 = vdwg.mxu0
    %487 = vst [vmem:[#allocation8] sm:$0xff] %v482
    // Predicated region
    $region42: #{tpu_custom_call.1} parent=1 // pred_check
      _
    $region43: #{tpu_custom_call.1} parent=1 // pred_check_branch
      %489 = sbr.rel (0) target = $region45
    $region44: #{tpu_custom_call.1} parent=1 // pred_region
      %s491 = ssub.s32 128, 128
      %492 = vsyncadd [#allocation4], %s491
      %s494 = sshll.u32 [#allocation8], 4
      %s495 = int_to_ptr.vmem [resolvable:$true] %s494
      %497 = dma.vmem_to_hbm [thread:$0]  %s495, 128, %s7, [#allocation4]
    $region45: #{tpu_custom_call.1} parent=1 // pred_fallthru
      _
    // Predicated region
    $region46: #{tpu_custom_call.1} parent=1 // pred_check
      _
    $region47: #{tpu_custom_call.1} parent=1 // pred_check_branch
      %499 = sbr.rel (0) target = $region49
    $region48: #{tpu_custom_call.1} parent=1 // pred_region
      %500 = dma.done [#allocation4], 128
    $region49: #{tpu_custom_call.1} parent=1 // pred_fallthru
      _
    %501 = vsyncpa [#allocation3], 1
    %502 = vsyncpa [#allocation6], 1
    %503 = vsyncpa [#allocation4], 1

</llo_original>
